<compile_context>
chip_gen: v7x
topology: tpu7x:2x2x1
jax: 0.10.0
libtpu: 0.0.40
codegen_flags: <defaults>
</compile_context>

<pallas_src>
import functools

import jax
import jax.numpy as jnp
from jax.experimental import pallas as pl
from jax.experimental.pallas import tpu as pltpu


def discriminator_kernel(x_ref, w1_ref, w2_ref, w3_ref, w4_ref,
                         b1_ref, b2_ref, b3_ref, b4_ref, o_ref, *, chunk, n_chunks):
    """Fused 4-layer MLP on one (tb, D) batch tile, transposed layout:
    activations are (features, batch_chunk) so the batch stays in the lane dim."""
    for j in range(n_chunks):                 # statically unrolled; all offsets constant
        lo = j * chunk
        xc = x_ref[lo:lo + chunk, :].astype(jnp.bfloat16)          # (chunk, D) bf16

        # Layer 1: h1^T = W1 . xc^T  -> (128, chunk); bf16 MXU, fp32 accumulation.
        h = jax.lax.dot_general(w1_ref[...], xc, (((1,), (1,)), ((), ())),
                                preferred_element_type=jnp.float32)
        h = h + b1_ref[...]                                        # (128,1) bcast over lanes
        h = jnp.where(h > 0, h, 0.1 * h).astype(jnp.bfloat16)      # LeakyReLU(0.1) in fp32

        # Layer 2: (64,128) @ (128,chunk) + Tanh (tanh kept in fp32).
        h = jnp.dot(w2_ref[...], h, preferred_element_type=jnp.float32) + b2_ref[...]
        h = jnp.tanh(h).astype(jnp.bfloat16)

        # Layer 3: (16,64) @ (64,chunk) + LeakyReLU(0.1); stays fp32 for the final layer.
        h = jnp.dot(w3_ref[...], h, preferred_element_type=jnp.float32) + b3_ref[...]
        h = jnp.where(h > 0, h, 0.1 * h)

        # Layer 4 (16 -> 1), fp32 on VPU/XLU (MXU stays free for the next chunk's dots):
        # broadcast-multiply by w4 (16,1) and reduce the 16 feature sublanes.
        y = jnp.sum(w4_ref[...] * h, axis=0, keepdims=True) + b4_ref[...]   # (1, chunk)
        o_ref[0:1, lo:lo + chunk] = jax.nn.sigmoid(y)              # lane-dense, unmasked store


def _round_up(n, m):
    return (n + m - 1) // m * m


def _padded_vmem_bytes(shape, itemsize):
    """VMEM footprint of one buffer of `shape` (last two dims padded to (8, 128))."""
    shape = tuple(shape)
    if len(shape) == 1:
        shape = (1,) + shape
    lead = 1
    for d in shape[:-2]:
        lead *= d
    return lead * _round_up(shape[-2], 8) * _round_up(shape[-1], 128) * itemsize


def _is_multi_tensorcore():
    """True on chips whose grid is sharded across >1 TensorCore (v4/v5p megacore, v7x)."""
    try:
        kind = jax.devices()[0].device_kind.lower().replace(" ", "")
    except Exception:
        return False
    return ("v7" in kind) or ("v4" in kind) or ("v5p" in kind)


def discriminator_forward(x, params):
    """x: (B, img_dim) float32. params in PyTorch layout (w: (out,in), b: (out,)).
    Returns (B, 1) float32."""
    w1, b1, w2, b2, w3, b3, w4, b4 = params
    B, D = x.shape

    # MXU weights in bf16 (fp32 accumulation requested in-kernel); final layer kept fp32.
    # Weights are tiny one-time conversions (in practice they would be stored this way).
    w1_bf = w1.astype(jnp.bfloat16)                    # (128, D)
    w2_bf = w2.astype(jnp.bfloat16)                    # (64, 128)
    w3_bf = w3.astype(jnp.bfloat16)                    # (16, 64)
    w4_col = w4.reshape(16, 1).astype(jnp.float32)     # (16, 1)  column for sublane reduce
    b1c = b1.reshape(128, 1).astype(jnp.float32)
    b2c = b2.reshape(64, 1).astype(jnp.float32)
    b3c = b3.reshape(16, 1).astype(jnp.float32)
    b4c = b4.reshape(1, 1).astype(jnp.float32)
    consts = (w1_bf, w2_bf, w3_bf, w4_col, b1c, b2c, b3c, b4c)

    # ---- batch-tile selection from the actual VMEM working set ----------------------
    lane_D = _round_up(D, 128)
    per_row = 2 * lane_D * 4 + 2 * 8 * 4               # dbl-buffered fp32 x row + out lane
    fixed = 2 * sum(_padded_vmem_bytes(c.shape, c.dtype.itemsize) for c in consts)
    budget = 40 * 1024 * 1024                          # conservative: v7x has 64 MiB / TC
    tb_vmem = max(128, ((budget - fixed - 4 * 1024 * 1024) // per_row) // 128 * 128)

    b128 = _round_up(B, 128)
    tb = min(4096 if D <= 128 else 2048, tb_vmem, b128)
    if _is_multi_tensorcore():
        # Keep >= 2 grid steps so both TensorCores get work.  Skipped on v5e/v6e where
        # the grid is a serial loop and halving the tile only adds per-step overhead.
        tb = min(tb, max(128, (b128 // 2) // 128 * 128))
    tb = max(128, tb // 128 * 128)

    chunk = 256 if tb % 256 == 0 else 128              # in-kernel sub-chunk (vreg budget)
    n_chunks = tb // chunk

    Bp = _round_up(B, tb)
    if Bp != B:
        x = jnp.pad(x, ((0, Bp - B), (0, 0)))          # only when B is not a tile multiple
    grid = Bp // tb

    vmem_limit = fixed + per_row * tb + 8 * 1024 * 1024        # + compiler scratch margin
    vmem_limit = int(min(max(vmem_limit, 16 * 1024 * 1024), 64 * 1024 * 1024))

    def rep(a):  # full-array block, constant index -> not re-DMA'd between grid steps
        return pl.BlockSpec(a.shape, lambda i: (0,) * a.ndim)

    out = pl.pallas_call(
        functools.partial(discriminator_kernel, chunk=chunk, n_chunks=n_chunks),
        out_shape=jax.ShapeDtypeStruct((1, Bp), jnp.float32),
        grid=(grid,),
        in_specs=[pl.BlockSpec((tb, D), lambda i: (i, 0))] + [rep(c) for c in consts],
        out_specs=pl.BlockSpec((1, tb), lambda i: (0, i)),   # lane-dense output row
        compiler_params=pltpu.CompilerParams(
            dimension_semantics=("parallel",),
            vmem_limit_bytes=vmem_limit,
        ),
    )(x, *consts)

    return out[0, :B].reshape(B, 1)


def init_params(key, img_dim):
    """Deterministic synthetic init, PyTorch-native layout: w (out,in), b (out,)."""
    dims = [(img_dim, 128), (128, 64), (64, 16), (16, 1)]
    params = []
    for idx, (fin, fout) in enumerate(dims):
        kw, kb = jax.random.split(jax.random.fold_in(key, idx))
        bound = 1.0 / (fin ** 0.5)
        w = jax.random.uniform(kw, (fout, fin), jnp.float32, -bound, bound)
        b = jax.random.uniform(kb, (fout,), jnp.float32, -bound, bound)
        params += [w, b]
    return tuple(params)


def reference_forward_fp32(x, params):
    """Pure fp32 reference — the PyTorch module semantics."""
    w1, b1, w2, b2, w3, b3, w4, b4 = params
    h = x @ w1.T + b1
    h = jnp.where(h > 0, h, 0.1 * h)
    h = jnp.tanh(h @ w2.T + b2)
    h = h @ w3.T + b3
    h = jnp.where(h > 0, h, 0.1 * h)
    return jax.nn.sigmoid(h @ w4.T + b4)


def reference_forward_mixed(x, params):
    """Mirrors the kernel's precision: bf16 matmul operands, fp32 accum, fp32 layer 4."""
    w1, b1, w2, b2, w3, b3, w4, b4 = params
    bf = jnp.bfloat16
    h = jnp.dot(x.astype(bf), w1.T.astype(bf), preferred_element_type=jnp.float32) + b1
    h = jnp.where(h > 0, h, 0.1 * h)
    h = jnp.dot(h.astype(bf), w2.T.astype(bf), preferred_element_type=jnp.float32) + b2
    h = jnp.tanh(h)
    h = jnp.dot(h.astype(bf), w3.T.astype(bf), preferred_element_type=jnp.float32) + b3
    h = jnp.where(h > 0, h, 0.1 * h)
    h = jnp.dot(h, w4.T, preferred_element_type=jnp.float32) + b4
    return jax.nn.sigmoid(h)


if __name__ == "__main__":
    key = jax.random.PRNGKey(0)
    img_dim = 64
    batch = 64   # not a multiple of the 128-row tile -> exercises the padding path

    kx, kp = jax.random.split(key)
    x = jax.random.normal(kx, (batch, img_dim), jnp.float32)
    params = init_params(kp, img_dim)

    out = discriminator_forward(x, params)
    out = jax.block_until_ready(out)

    ref_mixed = reference_forward_mixed(x, params)
    ref_fp32 = reference_forward_fp32(x, params)

    assert out.shape == (batch, 1)
    assert jnp.allclose(out, ref_mixed, atol=2e-3, rtol=2e-3), "mismatch vs bf16-matmul reference"
    assert jnp.allclose(out, ref_fp32, atol=5e-2), "mismatch vs fp32 reference"
    print("KERNEL_OK")
</pallas_src>

<mosaic_0001>
module attributes {stable_mosaic.version = 11 : i64} {
  func.func @discriminator_kernel(%arg0: i32, %arg1: memref<128x64xf32, #tpu.memory_space<vmem>>, %arg2: memref<128x64xbf16, #tpu.memory_space<vmem>>, %arg3: memref<64x128xbf16, #tpu.memory_space<vmem>>, %arg4: memref<16x64xbf16, #tpu.memory_space<vmem>>, %arg5: memref<16x1xf32, #tpu.memory_space<vmem>>, %arg6: memref<128x1xf32, #tpu.memory_space<vmem>>, %arg7: memref<64x1xf32, #tpu.memory_space<vmem>>, %arg8: memref<16x1xf32, #tpu.memory_space<vmem>>, %arg9: memref<1x1xf32, #tpu.memory_space<vmem>>, %arg10: memref<1x128xf32, #tpu.memory_space<vmem>>) attributes {dimension_semantics = [#tpu.dimension_semantics<parallel>], iteration_bounds = array<i64: 1>, scalar_prefetch = 0 : i64, scratch_operands = 0 : i64, tpu.core_type = #tpu.core_type<tc>, window_params = [{transform_indices = @transform_0, window_bounds = array<i64: 128, 64>}, {pipeline_mode = #tpu.pipeline_mode<synchronous>, transform_indices = @transform_1, window_bounds = array<i64: 128, 64>}, {pipeline_mode = #tpu.pipeline_mode<synchronous>, transform_indices = @transform_2, window_bounds = array<i64: 64, 128>}, {pipeline_mode = #tpu.pipeline_mode<synchronous>, transform_indices = @transform_3, window_bounds = array<i64: 16, 64>}, {pipeline_mode = #tpu.pipeline_mode<synchronous>, transform_indices = @transform_4, window_bounds = array<i64: 16, 1>}, {pipeline_mode = #tpu.pipeline_mode<synchronous>, transform_indices = @transform_5, window_bounds = array<i64: 128, 1>}, {pipeline_mode = #tpu.pipeline_mode<synchronous>, transform_indices = @transform_6, window_bounds = array<i64: 64, 1>}, {pipeline_mode = #tpu.pipeline_mode<synchronous>, transform_indices = @transform_7, window_bounds = array<i64: 16, 1>}, {pipeline_mode = #tpu.pipeline_mode<synchronous>, transform_indices = @transform_8, window_bounds = array<i64: 1, 1>}, {transform_indices = @transform_9, window_bounds = array<i64: 1, 128>}]} {
    %c0 = arith.constant 0 : index
    %c0_0 = arith.constant 0 : index
    %0 = vector.load %arg1[%c0, %c0_0] : memref<128x64xf32, #tpu.memory_space<vmem>>, vector<128x64xf32>
    %1 = arith.truncf %0 : vector<128x64xf32> to vector<128x64xbf16>
    %c0_1 = arith.constant 0 : index
    %c0_2 = arith.constant 0 : index
    %2 = vector.load %arg2[%c0_1, %c0_2] : memref<128x64xbf16, #tpu.memory_space<vmem>>, vector<128x64xbf16>
    %cst = arith.constant dense<0.000000e+00> : vector<128x128xf32>
    %3 = tpu.matmul %2, %1, %cst {dimension_numbers = #tpu.dot_dimension_numbers<[1], [1], [0], [0], [0, 0, 1, 0], [], []>} : vector<128x64xbf16>, vector<128x64xbf16>, vector<128x128xf32> -> vector<128x128xf32>
    %c0_3 = arith.constant 0 : index
    %c0_4 = arith.constant 0 : index
    %4 = vector.load %arg6[%c0_3, %c0_4] : memref<128x1xf32, #tpu.memory_space<vmem>>, vector<128x1xf32>
    %5 = vector.broadcast %4 : vector<128x1xf32> to vector<128x128xf32>
    %6 = arith.addf %3, %5 : vector<128x128xf32>
    %cst_5 = arith.constant 0.000000e+00 : f32
    %7 = vector.broadcast %cst_5 : f32 to vector<128x128xf32>
    %8 = arith.cmpf ogt, %6, %7 : vector<128x128xf32>
    %cst_6 = arith.constant 1.000000e-01 : f32
    %9 = vector.broadcast %cst_6 : f32 to vector<128x128xf32>
    %10 = arith.mulf %9, %6 : vector<128x128xf32>
    %11 = arith.select %8, %6, %10 : vector<128x128xi1>, vector<128x128xf32>
    %12 = arith.truncf %11 : vector<128x128xf32> to vector<128x128xbf16>
    %c0_7 = arith.constant 0 : index
    %c0_8 = arith.constant 0 : index
    %13 = vector.load %arg3[%c0_7, %c0_8] : memref<64x128xbf16, #tpu.memory_space<vmem>>, vector<64x128xbf16>
    %cst_9 = arith.constant dense<0.000000e+00> : vector<64x128xf32>
    %14 = tpu.matmul %13, %12, %cst_9 {dimension_numbers = #tpu.dot_dimension_numbers<[1], [0], [0], [1], [0, 0, 1, 1], [], []>} : vector<64x128xbf16>, vector<128x128xbf16>, vector<64x128xf32> -> vector<64x128xf32>
    %c0_10 = arith.constant 0 : index
    %c0_11 = arith.constant 0 : index
    %15 = vector.load %arg7[%c0_10, %c0_11] : memref<64x1xf32, #tpu.memory_space<vmem>>, vector<64x1xf32>
    %16 = vector.broadcast %15 : vector<64x1xf32> to vector<64x128xf32>
    %17 = arith.addf %14, %16 : vector<64x128xf32>
    %18 = math.tanh %17 : vector<64x128xf32>
    %19 = arith.truncf %18 : vector<64x128xf32> to vector<64x128xbf16>
    %c0_12 = arith.constant 0 : index
    %c0_13 = arith.constant 0 : index
    %20 = vector.load %arg4[%c0_12, %c0_13] : memref<16x64xbf16, #tpu.memory_space<vmem>>, vector<16x64xbf16>
    %cst_14 = arith.constant dense<0.000000e+00> : vector<16x128xf32>
    %21 = tpu.matmul %20, %19, %cst_14 {dimension_numbers = #tpu.dot_dimension_numbers<[1], [0], [0], [1], [0, 0, 1, 1], [], []>} : vector<16x64xbf16>, vector<64x128xbf16>, vector<16x128xf32> -> vector<16x128xf32>
    %c0_15 = arith.constant 0 : index
    %c0_16 = arith.constant 0 : index
    %22 = vector.load %arg8[%c0_15, %c0_16] : memref<16x1xf32, #tpu.memory_space<vmem>>, vector<16x1xf32>
    %23 = vector.broadcast %22 : vector<16x1xf32> to vector<16x128xf32>
    %24 = arith.addf %21, %23 : vector<16x128xf32>
    %cst_17 = arith.constant 0.000000e+00 : f32
    %25 = vector.broadcast %cst_17 : f32 to vector<16x128xf32>
    %26 = arith.cmpf ogt, %24, %25 : vector<16x128xf32>
    %cst_18 = arith.constant 1.000000e-01 : f32
    %27 = vector.broadcast %cst_18 : f32 to vector<16x128xf32>
    %28 = arith.mulf %27, %24 : vector<16x128xf32>
    %29 = arith.select %26, %24, %28 : vector<16x128xi1>, vector<16x128xf32>
    %c0_19 = arith.constant 0 : index
    %c0_20 = arith.constant 0 : index
    %30 = vector.load %arg5[%c0_19, %c0_20] : memref<16x1xf32, #tpu.memory_space<vmem>>, vector<16x1xf32>
    %31 = vector.broadcast %30 : vector<16x1xf32> to vector<16x128xf32>
    %32 = arith.mulf %31, %29 : vector<16x128xf32>
    %cst_21 = arith.constant dense<0.000000e+00> : vector<128xf32>
    %33 = vector.multi_reduction <add>, %32, %cst_21 [0] : vector<16x128xf32> to vector<128xf32>
    %34 = vector.shape_cast %33 : vector<128xf32> to vector<1x128xf32>
    %c0_22 = arith.constant 0 : index
    %c0_23 = arith.constant 0 : index
    %35 = vector.load %arg9[%c0_22, %c0_23] : memref<1x1xf32, #tpu.memory_space<vmem>>, vector<1x1xf32>
    %36 = vector.broadcast %35 : vector<1x1xf32> to vector<1x128xf32>
    %37 = arith.addf %34, %36 : vector<1x128xf32>
    %38 = arith.negf %37 : vector<1x128xf32>
    %39 = math.exp %38 : vector<1x128xf32>
    %cst_24 = arith.constant 1.000000e+00 : f32
    %40 = vector.broadcast %cst_24 : f32 to vector<1x128xf32>
    %41 = arith.addf %40, %39 : vector<1x128xf32>
    %42 = arith.divf %40, %41 : vector<1x128xf32>
    %c0_25 = arith.constant 0 : index
    %c0_26 = arith.constant 0 : index
    %43 = vector.load %arg10[%c0_25, %c0_26] : memref<1x128xf32, #tpu.memory_space<vmem>>, vector<1x128xf32>
    tpu.vector_store %arg10[%c0_25, %c0_26], %42 {strides = array<i32>} : memref<1x128xf32, #tpu.memory_space<vmem>>, vector<1x128xf32>,
    return
  }
  func.func @transform_0(%arg0: i32) -> (i32, i32) {
    %c0_i32 = arith.constant 0 : i32
    %c0_i32_0 = arith.constant 0 : i32
    return %arg0, %c0_i32 : i32, i32
  }
  func.func @transform_1(%arg0: i32) -> (i32, i32) {
    %c0_i32 = arith.constant 0 : i32
    %c0_i32_0 = arith.constant 0 : i32
    %c0_i32_1 = arith.constant 0 : i32
    return %c0_i32, %c0_i32_0 : i32, i32
  }
  func.func @transform_2(%arg0: i32) -> (i32, i32) {
    %c0_i32 = arith.constant 0 : i32
    %c0_i32_0 = arith.constant 0 : i32
    %c0_i32_1 = arith.constant 0 : i32
    return %c0_i32, %c0_i32_0 : i32, i32
  }
  func.func @transform_3(%arg0: i32) -> (i32, i32) {
    %c0_i32 = arith.constant 0 : i32
    %c0_i32_0 = arith.constant 0 : i32
    %c0_i32_1 = arith.constant 0 : i32
    return %c0_i32, %c0_i32_0 : i32, i32
  }
  func.func @transform_4(%arg0: i32) -> (i32, i32) {
    %c0_i32 = arith.constant 0 : i32
    %c0_i32_0 = arith.constant 0 : i32
    %c0_i32_1 = arith.constant 0 : i32
    return %c0_i32, %c0_i32_0 : i32, i32
  }
  func.func @transform_5(%arg0: i32) -> (i32, i32) {
    %c0_i32 = arith.constant 0 : i32
    %c0_i32_0 = arith.constant 0 : i32
    %c0_i32_1 = arith.constant 0 : i32
    return %c0_i32, %c0_i32_0 : i32, i32
  }
  func.func @transform_6(%arg0: i32) -> (i32, i32) {
    %c0_i32 = arith.constant 0 : i32
    %c0_i32_0 = arith.constant 0 : i32
    %c0_i32_1 = arith.constant 0 : i32
    return %c0_i32, %c0_i32_0 : i32, i32
  }
  func.func @transform_7(%arg0: i32) -> (i32, i32) {
    %c0_i32 = arith.constant 0 : i32
    %c0_i32_0 = arith.constant 0 : i32
    %c0_i32_1 = arith.constant 0 : i32
    return %c0_i32, %c0_i32_0 : i32, i32
  }
  func.func @transform_8(%arg0: i32) -> (i32, i32) {
    %c0_i32 = arith.constant 0 : i32
    %c0_i32_0 = arith.constant 0 : i32
    %c0_i32_1 = arith.constant 0 : i32
    return %c0_i32, %c0_i32_0 : i32, i32
  }
  func.func @transform_9(%arg0: i32) -> (i32, i32) {
    %c0_i32 = arith.constant 0 : i32
    %c0_i32_0 = arith.constant 0 : i32
    return %c0_i32, %arg0 : i32, i32
  }
}

</mosaic_0001>

<llo_original>
// kernel: tpu_custom_call.1
$region0: #{tpu_custom_call.1}
  #allocation0 [shape = 'u32[]', space=smem, size = 0x4, offset = 0x4, fixed_abs, tag = 'smem constant byte address 0x4 - core index']
  #allocation1 [shape = 'u32[144,128]{1,0:T(1,128)}', space=vmem, size = 0x12000, scoped, tag = 'internal scratch']
  #allocation2 [shape = 'f32[1,1]{1,0:T(1,128)S(1)}', space=vmem, size = 0x200, scoped, tag = 'scoped memory for tpu_custom_call.1']
  %s0 = inlined_call_operand.vmem [shape: f32[128,64], index: 0, kind: input, shape index: {}]
  %s1 = inlined_call_operand.vmem [shape: bf16[128,64], index: 1, kind: input, shape index: {}]
  %s2 = inlined_call_operand.vmem [shape: bf16[64,128], index: 2, kind: input, shape index: {}]
  %s3 = inlined_call_operand.vmem [shape: bf16[16,64], index: 3, kind: input, shape index: {}]
  %s4 = inlined_call_operand.vmem [shape: f32[16,1], index: 4, kind: input, shape index: {}]
  %s5 = inlined_call_operand.vmem [shape: f32[128,1], index: 5, kind: input, shape index: {}]
  %s6 = inlined_call_operand.vmem [shape: f32[64,1], index: 6, kind: input, shape index: {}]
  %s7 = inlined_call_operand.vmem [shape: f32[16,1], index: 7, kind: input, shape index: {}]
  %s8 = inlined_call_operand.<no memory space> [shape: f32[1,1], index: 8, kind: input, shape index: {}]
  %s9 = inlined_call_operand.hbm [shape: f32[1,128], index: 9, kind: output, shape index: {}]
  %s10 = sld [smem:[#allocation0]]
  $region46: #{tpu_custom_call.1} parent=0
    _
  %s12 = ssub.s32 1, %s10
  %s13 = scalar_select 0, %s12, %s10
  %v14 = vstv %s8
  %15 = vst [vmem:[#allocation2] sm:$0x1] %v14
  $region1: #{tpu_custom_call.1} parent=0
    #allocation3 [shape = 'u8[512]{0}', space=vmem, size = 0x400, scoped, tag = 'output window, operand 0, single buffered']
    #allocation4 [shape = 's32[1]{0}', space=sflag, size = 0x4, scoped, tag = 'scoped memory for tpu_custom_call.1']
    %16 = vsyncpa [#allocation4], 0
    // Predicated region
    $region2: #{tpu_custom_call.1} parent=1 // pred_check
      _
    $region3: #{tpu_custom_call.1} parent=1 // pred_check_branch
      %18 = sbr.rel (0) target = $region5
    $region4: #{tpu_custom_call.1} parent=1 // pred_region
      _
    $region5: #{tpu_custom_call.1} parent=1 // pred_fallthru
      _
    // Predicated region
    $region6: #{tpu_custom_call.1} parent=1 // pred_check
      _
    $region7: #{tpu_custom_call.1} parent=1 // pred_check_branch
      %20 = sbr.rel (0) target = $region9
    $region8: #{tpu_custom_call.1} parent=1 // pred_region
      _
    $region9: #{tpu_custom_call.1} parent=1 // pred_fallthru
      _
    // Predicated region
    $region10: #{tpu_custom_call.1} parent=1 // pred_check
      _
    $region11: #{tpu_custom_call.1} parent=1 // pred_check_branch
      %22 = sbr.rel (0) target = $region13
    $region12: #{tpu_custom_call.1} parent=1 // pred_region
      _
    $region13: #{tpu_custom_call.1} parent=1 // pred_fallthru
      _
    // Predicated region
    $region14: #{tpu_custom_call.1} parent=1 // pred_check
      _
    $region15: #{tpu_custom_call.1} parent=1 // pred_check_branch
      %24 = sbr.rel (0) target = $region17
    $region16: #{tpu_custom_call.1} parent=1 // pred_region
      _
    $region17: #{tpu_custom_call.1} parent=1 // pred_fallthru
      _
    // Predicated region
    $region18: #{tpu_custom_call.1} parent=1 // pred_check
      _
    $region19: #{tpu_custom_call.1} parent=1 // pred_check_branch
      %26 = sbr.rel (0) target = $region21
    $region20: #{tpu_custom_call.1} parent=1 // pred_region
      _
    $region21: #{tpu_custom_call.1} parent=1 // pred_fallthru
      _
    // Predicated region
    $region22: #{tpu_custom_call.1} parent=1 // pred_check
      _
    $region23: #{tpu_custom_call.1} parent=1 // pred_check_branch
      %28 = sbr.rel (0) target = $region25
    $region24: #{tpu_custom_call.1} parent=1 // pred_region
      _
    $region25: #{tpu_custom_call.1} parent=1 // pred_fallthru
      _
    // Predicated region
    $region26: #{tpu_custom_call.1} parent=1 // pred_check
      _
    $region27: #{tpu_custom_call.1} parent=1 // pred_check_branch
      %30 = sbr.rel (0) target = $region29
    $region28: #{tpu_custom_call.1} parent=1 // pred_region
      _
    $region29: #{tpu_custom_call.1} parent=1 // pred_fallthru
      _
    // Predicated region
    $region30: #{tpu_custom_call.1} parent=1 // pred_check
      _
    $region31: #{tpu_custom_call.1} parent=1 // pred_check_branch
      %32 = sbr.rel (0) target = $region33
    $region32: #{tpu_custom_call.1} parent=1 // pred_region
      _
    $region33: #{tpu_custom_call.1} parent=1 // pred_fallthru
      _
    // Predicated region
    $region34: #{tpu_custom_call.1} parent=1 // pred_check
      _
    $region35: #{tpu_custom_call.1} parent=1 // pred_check_branch
      %34 = sbr.rel (0) target = $region37
    $region36: #{tpu_custom_call.1} parent=1 // pred_region
      _
    $region37: #{tpu_custom_call.1} parent=1 // pred_fallthru
      _
    %v36 = vld [vmem:[%s0] sm:$0xff]
    %v37 = vld [vmem:[%s0 + $0x8] sm:$0xff]
    %v38 = vld [vmem:[%s0 + $0x10] sm:$0xff]
    %v39 = vld [vmem:[%s0 + $0x18] sm:$0xff]
    %v40 = vld [vmem:[%s0 + $0x20] sm:$0xff]
    %v41 = vld [vmem:[%s0 + $0x28] sm:$0xff]
    %v42 = vld [vmem:[%s0 + $0x30] sm:$0xff]
    %v43 = vld [vmem:[%s0 + $0x38] sm:$0xff]
    %v44 = vld [vmem:[%s0 + $0x40] sm:$0xff]
    %v45 = vld [vmem:[%s0 + $0x48] sm:$0xff]
    %v46 = vld [vmem:[%s0 + $0x50] sm:$0xff]
    %v47 = vld [vmem:[%s0 + $0x58] sm:$0xff]
    %v48 = vld [vmem:[%s0 + $0x60] sm:$0xff]
    %v49 = vld [vmem:[%s0 + $0x68] sm:$0xff]
    %v50 = vld [vmem:[%s0 + $0x70] sm:$0xff]
    %v51 = vld [vmem:[%s0 + $0x78] sm:$0xff]
    %v52 = vpack.c.bf16 %v37, %v36
    %v53 = vpack.c.bf16 %v39, %v38
    %v54 = vpack.c.bf16 %v41, %v40
    %v55 = vpack.c.bf16 %v43, %v42
    %v56 = vpack.c.bf16 %v45, %v44
    %v57 = vpack.c.bf16 %v47, %v46
    %v58 = vpack.c.bf16 %v49, %v48
    %v59 = vpack.c.bf16 %v51, %v50
    %v60 = vld [vmem:[%s1] sm:$0xf]
    %v61 = vld [vmem:[%s1 + $0x4] sm:$0xf]
    %v62 = vld [vmem:[%s1 + $0x8] sm:$0xf]
    %v63 = vld [vmem:[%s1 + $0xc] sm:$0xf]
    %v64 = vld [vmem:[%s1 + $0x10] sm:$0xf]
    %v65 = vld [vmem:[%s1 + $0x14] sm:$0xf]
    %v66 = vld [vmem:[%s1 + $0x18] sm:$0xf]
    %v67 = vld [vmem:[%s1 + $0x1c] sm:$0xf]
    %v68 = vld [vmem:[%s1 + $0x20] sm:$0xf]
    %v69 = vld [vmem:[%s1 + $0x24] sm:$0xf]
    %v70 = vld [vmem:[%s1 + $0x28] sm:$0xf]
    %v71 = vld [vmem:[%s1 + $0x2c] sm:$0xf]
    %v72 = vld [vmem:[%s1 + $0x30] sm:$0xf]
    %v73 = vld [vmem:[%s1 + $0x34] sm:$0xf]
    %v74 = vld [vmem:[%s1 + $0x38] sm:$0xf]
    %v75 = vld [vmem:[%s1 + $0x3c] sm:$0xf]
    %v76 = vld [vmem:[%s5] sm:$0xff]
    %v77 = vld [vmem:[%s5 + $0x8] sm:$0xff]
    %v78 = vld [vmem:[%s5 + $0x10] sm:$0xff]
    %v79 = vld [vmem:[%s5 + $0x18] sm:$0xff]
    %v80 = vld [vmem:[%s5 + $0x20] sm:$0xff]
    %v81 = vld [vmem:[%s5 + $0x28] sm:$0xff]
    %v82 = vld [vmem:[%s5 + $0x30] sm:$0xff]
    %v83 = vld [vmem:[%s5 + $0x38] sm:$0xff]
    %v84 = vld [vmem:[%s5 + $0x40] sm:$0xff]
    %v85 = vld [vmem:[%s5 + $0x48] sm:$0xff]
    %v86 = vld [vmem:[%s5 + $0x50] sm:$0xff]
    %v87 = vld [vmem:[%s5 + $0x58] sm:$0xff]
    %v88 = vld [vmem:[%s5 + $0x60] sm:$0xff]
    %v89 = vld [vmem:[%s5 + $0x68] sm:$0xff]
    %v90 = vld [vmem:[%s5 + $0x70] sm:$0xff]
    %v91 = vld [vmem:[%s5 + $0x78] sm:$0xff]
    %93 = vset.pattern.permute.xlu0 0
    %94 = vperm.xlu0 %93, %v76
    %v95 = vpop.permute.xlu0 %94
    %98 = vset.pattern.permute.xlu0 0
    %99 = vperm.xlu0 %98, %v77
    %v100 = vpop.permute.xlu0 %99
    %103 = vset.pattern.permute.xlu0 0
    %104 = vperm.xlu0 %103, %v78
    %v105 = vpop.permute.xlu0 %104
    %108 = vset.pattern.permute.xlu0 0
    %109 = vperm.xlu0 %108, %v79
    %v110 = vpop.permute.xlu0 %109
    %113 = vset.pattern.permute.xlu0 0
    %114 = vperm.xlu0 %113, %v80
    %v115 = vpop.permute.xlu0 %114
    %118 = vset.pattern.permute.xlu0 0
    %119 = vperm.xlu0 %118, %v81
    %v120 = vpop.permute.xlu0 %119
    %123 = vset.pattern.permute.xlu0 0
    %124 = vperm.xlu0 %123, %v82
    %v125 = vpop.permute.xlu0 %124
    %128 = vset.pattern.permute.xlu0 0
    %129 = vperm.xlu0 %128, %v83
    %v130 = vpop.permute.xlu0 %129
    %133 = vset.pattern.permute.xlu0 0
    %134 = vperm.xlu0 %133, %v84
    %v135 = vpop.permute.xlu0 %134
    %138 = vset.pattern.permute.xlu0 0
    %139 = vperm.xlu0 %138, %v85
    %v140 = vpop.permute.xlu0 %139
    %143 = vset.pattern.permute.xlu0 0
    %144 = vperm.xlu0 %143, %v86
    %v145 = vpop.permute.xlu0 %144
    %148 = vset.pattern.permute.xlu0 0
    %149 = vperm.xlu0 %148, %v87
    %v150 = vpop.permute.xlu0 %149
    %153 = vset.pattern.permute.xlu0 0
    %154 = vperm.xlu0 %153, %v88
    %v155 = vpop.permute.xlu0 %154
    %158 = vset.pattern.permute.xlu0 0
    %159 = vperm.xlu0 %158, %v89
    %v160 = vpop.permute.xlu0 %159
    %163 = vset.pattern.permute.xlu0 0
    %164 = vperm.xlu0 %163, %v90
    %v165 = vpop.permute.xlu0 %164
    %168 = vset.pattern.permute.xlu0 0
    %169 = vperm.xlu0 %168, %v91
    %v170 = vpop.permute.xlu0 %169
    %v188 = vunpack.c.l.b16 %v60
    %v189 = vunpack.c.l.b16 %v61
    %v190 = vunpack.c.l.b16 %v62
    %v191 = vunpack.c.l.b16 %v63
    %v192 = vunpack.c.l.b16 %v64
    %v193 = vunpack.c.l.b16 %v65
    %v194 = vunpack.c.l.b16 %v66
    %v195 = vunpack.c.l.b16 %v67
    %v196 = vunpack.c.l.b16 %v68
    %v197 = vunpack.c.l.b16 %v69
    %v198 = vunpack.c.l.b16 %v70
    %v199 = vunpack.c.l.b16 %v71
    %v200 = vunpack.c.l.b16 %v72
    %v201 = vunpack.c.l.b16 %v73
    %v202 = vunpack.c.l.b16 %v74
    %v203 = vunpack.c.l.b16 %v75
    %v204 = vpack.c.b16 %v189, %v188
    %v205 = vpack.c.b16 %v191, %v190
    %v206 = vpack.c.b16 %v193, %v192
    %v207 = vpack.c.b16 %v195, %v194
    %v208 = vpack.c.b16 %v197, %v196
    %v209 = vpack.c.b16 %v199, %v198
    %v210 = vpack.c.b16 %v201, %v200
    %v211 = vpack.c.b16 %v203, %v202
    %vm212 = vcmask 523264
    %v214 = vsel %vm212, %v204, 0
    %v217 = vsel %vm212, %v205, 0
    %v220 = vsel %vm212, %v206, 0
    %v223 = vsel %vm212, %v207, 0
    %v226 = vsel %vm212, %v208, 0
    %v229 = vsel %vm212, %v209, 0
    %v232 = vsel %vm212, %v210, 0
    %v235 = vsel %vm212, %v211, 0
    %v238 = vsel %vm212, %v52, 0
    %v241 = vsel %vm212, %v53, 0
    %v244 = vsel %vm212, %v54, 0
    %v247 = vsel %vm212, %v55, 0
    %v250 = vsel %vm212, %v56, 0
    %v253 = vsel %vm212, %v57, 0
    %v256 = vsel %vm212, %v58, 0
    %v259 = vsel %vm212, %v59, 0
    %261 = vmatprep.subr.bf16.mxu0 0
    %262 = vmatpush1.bf16.xpose.msra.mxu0 %v238
    %263 = vmatprep.subr.bf16.mxu0 0
    %264 = vmatpush1.bf16.xpose.msra.mxu0 %v241
    %265 = vmatprep.subr.bf16.mxu0 0
    %266 = vmatpush1.bf16.xpose.msra.mxu0 %v244
    %267 = vmatprep.subr.bf16.mxu0 0
    %268 = vmatpush1.bf16.xpose.msra.mxu0 %v247
    %269 = vmatprep.subr.bf16.mxu0 0
    %270 = vmatpush1.bf16.xpose.msra.mxu0 %v250
    %271 = vmatprep.subr.bf16.mxu0 0
    %272 = vmatpush1.bf16.xpose.msra.mxu0 %v253
    %273 = vmatprep.subr.bf16.mxu0 0
    %274 = vmatpush1.bf16.xpose.msra.mxu0 %v256
    %275 = vmatprep.subr.bf16.mxu0 0
    %276 = vmatpush1.bf16.xpose.msra.mxu0 %v259
    %277 = vmatprep.subr.bf16.mxu0 0
    %278 = vmatpush1.bf16.xpose.msra.mxu0 0
    %279 = vmatprep.subr.bf16.mxu0 0
    %280 = vmatpush1.bf16.xpose.msra.mxu0 0
    %281 = vmatprep.subr.bf16.mxu0 0
    %282 = vmatpush1.bf16.xpose.msra.mxu0 0
    %283 = vmatprep.subr.bf16.mxu0 0
    %284 = vmatpush1.bf16.xpose.msra.mxu0 0
    %285 = vmatprep.subr.bf16.mxu0 0
    %286 = vmatpush1.bf16.xpose.msra.mxu0 0
    %287 = vmatprep.subr.bf16.mxu0 0
    %288 = vmatpush1.bf16.xpose.msra.mxu0 0
    %289 = vmatprep.subr.bf16.mxu0 0
    %290 = vmatpush1.bf16.xpose.msra.mxu0 0
    %291 = vmatprep.subr.bf16.mxu0 0
    %292 = vmatpush1.bf16.xpose.msra.mxu0 0
    %293 = vmatprep.mubr.bf16.mxu0 0
    %294 = vmatmul.mubr.bf16.gmra.mrb[0].mxu0 %v214
    %v295 = vpop.f32.mrb[0].mxu0
    %v296 = vadd.f32 %v95, %v295
    %v297 = vpop.f32.mrb[0].mxu0
    %v298 = vpop.f32.mrb[0].mxu0
    %v299 = vadd.f32 %v100, %v298
    %v300 = vpop.f32.mrb[0].mxu0
    %301 = vmatprep.mubr.bf16.mxu0 0
    %302 = vmatmul.mubr.bf16.gmra.mrb[0].mxu0 %v217
    %v303 = vpop.f32.mrb[0].mxu0
    %v304 = vadd.f32 %v105, %v303
    %v305 = vpop.f32.mrb[0].mxu0
    %v306 = vpop.f32.mrb[0].mxu0
    %v307 = vadd.f32 %v110, %v306
    %v308 = vpop.f32.mrb[0].mxu0
    %309 = vmatprep.mubr.bf16.mxu0 0
    %310 = vmatmul.mubr.bf16.gmra.mrb[0].mxu0 %v220
    %v311 = vpop.f32.mrb[0].mxu0
    %v312 = vadd.f32 %v115, %v311
    %v313 = vpop.f32.mrb[0].mxu0
    %v314 = vpop.f32.mrb[0].mxu0
    %v315 = vadd.f32 %v120, %v314
    %v316 = vpop.f32.mrb[0].mxu0
    %317 = vmatprep.mubr.bf16.mxu0 0
    %318 = vmatmul.mubr.bf16.gmra.mrb[0].mxu0 %v223
    %v319 = vpop.f32.mrb[0].mxu0
    %v320 = vadd.f32 %v125, %v319
    %v321 = vpop.f32.mrb[0].mxu0
    %v322 = vpop.f32.mrb[0].mxu0
    %v323 = vadd.f32 %v130, %v322
    %v324 = vpop.f32.mrb[0].mxu0
    %325 = vmatprep.mubr.bf16.mxu0 0
    %326 = vmatmul.mubr.bf16.gmra.mrb[0].mxu0 %v226
    %v327 = vpop.f32.mrb[0].mxu0
    %v328 = vadd.f32 %v135, %v327
    %v329 = vpop.f32.mrb[0].mxu0
    %v330 = vpop.f32.mrb[0].mxu0
    %v331 = vadd.f32 %v140, %v330
    %v332 = vpop.f32.mrb[0].mxu0
    %333 = vmatprep.mubr.bf16.mxu0 0
    %334 = vmatmul.mubr.bf16.gmra.mrb[0].mxu0 %v229
    %v335 = vpop.f32.mrb[0].mxu0
    %v336 = vadd.f32 %v145, %v335
    %v337 = vpop.f32.mrb[0].mxu0
    %v338 = vpop.f32.mrb[0].mxu0
    %v339 = vadd.f32 %v150, %v338
    %v340 = vpop.f32.mrb[0].mxu0
    %341 = vmatprep.mubr.bf16.mxu0 0
    %342 = vmatmul.mubr.bf16.gmra.mrb[0].mxu0 %v232
    %v343 = vpop.f32.mrb[0].mxu0
    %v344 = vadd.f32 %v155, %v343
    %v345 = vpop.f32.mrb[0].mxu0
    %v346 = vpop.f32.mrb[0].mxu0
    %v347 = vadd.f32 %v160, %v346
    %v348 = vpop.f32.mrb[0].mxu0
    %349 = vmatprep.mubr.bf16.mxu0 0
    %350 = vmatmul.mubr.bf16.gmra.mrb[0].mxu0 %v235
    %v351 = vpop.f32.mrb[0].mxu0
    %v352 = vadd.f32 %v165, %v351
    %v353 = vpop.f32.mrb[0].mxu0
    %v354 = vpop.f32.mrb[0].mxu0
    %v355 = vadd.f32 %v170, %v354
    %v356 = vpop.f32.mrb[0].mxu0
    %357 = vdwg.mxu0
    %vm358 = vcmp.gt.f32.partialorder %v296, 0.0
    %vm359 = vcmp.gt.f32.partialorder %v299, 0.0
    %vm360 = vcmp.gt.f32.partialorder %v304, 0.0
    %vm361 = vcmp.gt.f32.partialorder %v307, 0.0
    %vm362 = vcmp.gt.f32.partialorder %v312, 0.0
    %vm363 = vcmp.gt.f32.partialorder %v315, 0.0
    %vm364 = vcmp.gt.f32.partialorder %v320, 0.0
    %vm365 = vcmp.gt.f32.partialorder %v323, 0.0
    %vm366 = vcmp.gt.f32.partialorder %v328, 0.0
    %vm367 = vcmp.gt.f32.partialorder %v331, 0.0
    %vm368 = vcmp.gt.f32.partialorder %v336, 0.0
    %vm369 = vcmp.gt.f32.partialorder %v339, 0.0
    %vm370 = vcmp.gt.f32.partialorder %v344, 0.0
    %vm371 = vcmp.gt.f32.partialorder %v347, 0.0
    %vm372 = vcmp.gt.f32.partialorder %v352, 0.0
    %vm373 = vcmp.gt.f32.partialorder %v355, 0.0
    %v374 = vmul.f32 %v296, 0.1
    %v375 = vmul.f32 %v299, 0.1
    %v376 = vmul.f32 %v304, 0.1
    %v377 = vmul.f32 %v307, 0.1
    %v378 = vmul.f32 %v312, 0.1
    %v379 = vmul.f32 %v315, 0.1
    %v380 = vmul.f32 %v320, 0.1
    %v381 = vmul.f32 %v323, 0.1
    %v382 = vmul.f32 %v328, 0.1
    %v383 = vmul.f32 %v331, 0.1
    %v384 = vmul.f32 %v336, 0.1
    %v385 = vmul.f32 %v339, 0.1
    %v386 = vmul.f32 %v344, 0.1
    %v387 = vmul.f32 %v347, 0.1
    %v388 = vmul.f32 %v352, 0.1
    %v389 = vmul.f32 %v355, 0.1
    %v390 = vsel %vm358, %v296, %v374
    %v391 = vsel %vm359, %v299, %v375
    %v392 = vsel %vm360, %v304, %v376
    %v393 = vsel %vm361, %v307, %v377
    %v394 = vsel %vm362, %v312, %v378
    %v395 = vsel %vm363, %v315, %v379
    %v396 = vsel %vm364, %v320, %v380
    %v397 = vsel %vm365, %v323, %v381
    %v398 = vsel %vm366, %v328, %v382
    %v399 = vsel %vm367, %v331, %v383
    %v400 = vsel %vm368, %v336, %v384
    %v401 = vsel %vm369, %v339, %v385
    %v402 = vsel %vm370, %v344, %v386
    %v403 = vsel %vm371, %v347, %v387
    %v404 = vsel %vm372, %v352, %v388
    %v405 = vsel %vm373, %v355, %v389
    %v406 = vpack.c.bf16 %v391, %v390
    %v407 = vpack.c.bf16 %v393, %v392
    %v408 = vpack.c.bf16 %v395, %v394
    %v409 = vpack.c.bf16 %v397, %v396
    %v410 = vpack.c.bf16 %v399, %v398
    %v411 = vpack.c.bf16 %v401, %v400
    %v412 = vpack.c.bf16 %v403, %v402
    %v413 = vpack.c.bf16 %v405, %v404
    %v414 = vld [vmem:[%s2] sm:$0xf]
    %v415 = vld [vmem:[%s2 + $0x4] sm:$0xf]
    %v416 = vld [vmem:[%s2 + $0x8] sm:$0xf]
    %v417 = vld [vmem:[%s2 + $0xc] sm:$0xf]
    %v418 = vld [vmem:[%s2 + $0x10] sm:$0xf]
    %v419 = vld [vmem:[%s2 + $0x14] sm:$0xf]
    %v420 = vld [vmem:[%s2 + $0x18] sm:$0xf]
    %v421 = vld [vmem:[%s2 + $0x1c] sm:$0xf]
    %v422 = vld [vmem:[%s6] sm:$0xff]
    %v423 = vld [vmem:[%s6 + $0x8] sm:$0xff]
    %v424 = vld [vmem:[%s6 + $0x10] sm:$0xff]
    %v425 = vld [vmem:[%s6 + $0x18] sm:$0xff]
    %v426 = vld [vmem:[%s6 + $0x20] sm:$0xff]
    %v427 = vld [vmem:[%s6 + $0x28] sm:$0xff]
    %v428 = vld [vmem:[%s6 + $0x30] sm:$0xff]
    %v429 = vld [vmem:[%s6 + $0x38] sm:$0xff]
    %431 = vset.pattern.permute.xlu0 0
    %432 = vperm.xlu0 %431, %v422
    %v433 = vpop.permute.xlu0 %432
    %436 = vset.pattern.permute.xlu0 0
    %437 = vperm.xlu0 %436, %v423
    %v438 = vpop.permute.xlu0 %437
    %441 = vset.pattern.permute.xlu0 0
    %442 = vperm.xlu0 %441, %v424
    %v443 = vpop.permute.xlu0 %442
    %446 = vset.pattern.permute.xlu0 0
    %447 = vperm.xlu0 %446, %v425
    %v448 = vpop.permute.xlu0 %447
    %451 = vset.pattern.permute.xlu0 0
    %452 = vperm.xlu0 %451, %v426
    %v453 = vpop.permute.xlu0 %452
    %456 = vset.pattern.permute.xlu0 0
    %457 = vperm.xlu0 %456, %v427
    %v458 = vpop.permute.xlu0 %457
    %461 = vset.pattern.permute.xlu0 0
    %462 = vperm.xlu0 %461, %v428
    %v463 = vpop.permute.xlu0 %462
    %466 = vset.pattern.permute.xlu0 0
    %467 = vperm.xlu0 %466, %v429
    %v468 = vpop.permute.xlu0 %467
    %v478 = vunpack.c.l.b16 %v414
    %v479 = vunpack.c.l.b16 %v415
    %v480 = vunpack.c.l.b16 %v416
    %v481 = vunpack.c.l.b16 %v417
    %v482 = vunpack.c.l.b16 %v418
    %v483 = vunpack.c.l.b16 %v419
    %v484 = vunpack.c.l.b16 %v420
    %v485 = vunpack.c.l.b16 %v421
    %v486 = vpack.c.b16 %v479, %v478
    %v487 = vpack.c.b16 %v481, %v480
    %v488 = vpack.c.b16 %v483, %v482
    %v489 = vpack.c.b16 %v485, %v484
    %494 = vmatprep.subr.bf16.mxu0 0
    %495 = vmatpush1.bf16.msra.mxu0 %v406
    %496 = vmatprep.subr.bf16.mxu0 0
    %497 = vmatpush1.bf16.msra.mxu0 %v407
    %498 = vmatprep.subr.bf16.mxu0 0
    %499 = vmatpush1.bf16.msra.mxu0 %v408
    %500 = vmatprep.subr.bf16.mxu0 0
    %501 = vmatpush1.bf16.msra.mxu0 %v409
    %502 = vmatprep.subr.bf16.mxu0 0
    %503 = vmatpush1.bf16.msra.mxu0 %v410
    %504 = vmatprep.subr.bf16.mxu0 0
    %505 = vmatpush1.bf16.msra.mxu0 %v411
    %506 = vmatprep.subr.bf16.mxu0 0
    %507 = vmatpush1.bf16.msra.mxu0 %v412
    %508 = vmatprep.subr.bf16.mxu0 0
    %509 = vmatpush1.bf16.msra.mxu0 %v413
    %510 = vmatprep.subr.bf16.mxu0 0
    %511 = vmatpush1.bf16.msra.mxu0 0
    %512 = vmatprep.subr.bf16.mxu0 0
    %513 = vmatpush1.bf16.msra.mxu0 0
    %514 = vmatprep.subr.bf16.mxu0 0
    %515 = vmatpush1.bf16.msra.mxu0 0
    %516 = vmatprep.subr.bf16.mxu0 0
    %517 = vmatpush1.bf16.msra.mxu0 0
    %518 = vmatprep.subr.bf16.mxu0 0
    %519 = vmatpush1.bf16.msra.mxu0 0
    %520 = vmatprep.subr.bf16.mxu0 0
    %521 = vmatpush1.bf16.msra.mxu0 0
    %522 = vmatprep.subr.bf16.mxu0 0
    %523 = vmatpush1.bf16.msra.mxu0 0
    %524 = vmatprep.subr.bf16.mxu0 0
    %525 = vmatpush1.bf16.msra.mxu0 0
    %526 = vmatprep.mubr.bf16.mxu0 0
    %527 = vmatmul.mubr.bf16.gmra.mrb[0].mxu0 %v486
    %v528 = vpop.f32.mrb[0].mxu0
    %v529 = vadd.f32 %v433, %v528
    %v530 = vpop.f32.mrb[0].mxu0
    %v531 = vpop.f32.mrb[0].mxu0
    %v532 = vadd.f32 %v438, %v531
    %v533 = vpop.f32.mrb[0].mxu0
    %534 = vmatprep.mubr.bf16.mxu0 0
    %535 = vmatmul.mubr.bf16.gmra.mrb[0].mxu0 %v487
    %v536 = vpop.f32.mrb[0].mxu0
    %v537 = vadd.f32 %v443, %v536
    %v538 = vpop.f32.mrb[0].mxu0
    %v539 = vpop.f32.mrb[0].mxu0
    %v540 = vadd.f32 %v448, %v539
    %v541 = vpop.f32.mrb[0].mxu0
    %542 = vmatprep.mubr.bf16.mxu0 0
    %543 = vmatmul.mubr.bf16.gmra.mrb[0].mxu0 %v488
    %v544 = vpop.f32.mrb[0].mxu0
    %v545 = vadd.f32 %v453, %v544
    %v546 = vpop.f32.mrb[0].mxu0
    %v547 = vpop.f32.mrb[0].mxu0
    %v548 = vadd.f32 %v458, %v547
    %v549 = vpop.f32.mrb[0].mxu0
    %550 = vmatprep.mubr.bf16.mxu0 0
    %551 = vmatmul.mubr.bf16.gmra.mrb[0].mxu0 %v489
    %v552 = vpop.f32.mrb[0].mxu0
    %v553 = vadd.f32 %v463, %v552
    %v554 = vpop.f32.mrb[0].mxu0
    %v555 = vpop.f32.mrb[0].mxu0
    %v556 = vadd.f32 %v468, %v555
    %v557 = vpop.f32.mrb[0].mxu0
    %558 = vdwg.mxu0
    %v559 = vtanh.pop %v529
    %v560 = vtanh.pop %v532
    %v561 = vtanh.pop %v537
    %v562 = vtanh.pop %v540
    %v563 = vtanh.pop %v545
    %v564 = vtanh.pop %v548
    %v565 = vtanh.pop %v553
    %v566 = vtanh.pop %v556
    %v567 = vpack.c.bf16 %v560, %v559
    %v568 = vpack.c.bf16 %v562, %v561
    %v569 = vpack.c.bf16 %v564, %v563
    %v570 = vpack.c.bf16 %v566, %v565
    %v571 = vld [vmem:[%s3] sm:$0xf]
    %v572 = vld [vmem:[%s3 + $0x4] sm:$0xf]
    %v573 = vld [vmem:[%s7] sm:$0xff]
    %v574 = vld [vmem:[%s7 + $0x8] sm:$0xff]
    %576 = vset.pattern.permute.xlu0 0
    %577 = vperm.xlu0 %576, %v573
    %v578 = vpop.permute.xlu0 %577
    %581 = vset.pattern.permute.xlu0 0
    %582 = vperm.xlu0 %581, %v574
    %v583 = vpop.permute.xlu0 %582
    %v587 = vunpack.c.l.b16 %v571
    %v588 = vunpack.c.l.b16 %v572
    %v589 = vpack.c.b16 %v588, %v587
    %v591 = vsel %vm212, %v589, 0
    %593 = vmatprep.subr.bf16.mxu0 0
    %594 = vmatpush1.bf16.msra.mxu0 %v567
    %595 = vmatprep.subr.bf16.mxu0 0
    %596 = vmatpush1.bf16.msra.mxu0 %v568
    %597 = vmatprep.subr.bf16.mxu0 0
    %598 = vmatpush1.bf16.msra.mxu0 %v569
    %599 = vmatprep.subr.bf16.mxu0 0
    %600 = vmatpush1.bf16.msra.mxu0 %v570
    %601 = vmatprep.subr.bf16.mxu0 0
    %602 = vmatpush1.bf16.msra.mxu0 0
    %603 = vmatprep.subr.bf16.mxu0 0
    %604 = vmatpush1.bf16.msra.mxu0 0
    %605 = vmatprep.subr.bf16.mxu0 0
    %606 = vmatpush1.bf16.msra.mxu0 0
    %607 = vmatprep.subr.bf16.mxu0 0
    %608 = vmatpush1.bf16.msra.mxu0 0
    %609 = vmatprep.subr.bf16.mxu0 0
    %610 = vmatpush1.bf16.msra.mxu0 0
    %611 = vmatprep.subr.bf16.mxu0 0
    %612 = vmatpush1.bf16.msra.mxu0 0
    %613 = vmatprep.subr.bf16.mxu0 0
    %614 = vmatpush1.bf16.msra.mxu0 0
    %615 = vmatprep.subr.bf16.mxu0 0
    %616 = vmatpush1.bf16.msra.mxu0 0
    %617 = vmatprep.subr.bf16.mxu0 0
    %618 = vmatpush1.bf16.msra.mxu0 0
    %619 = vmatprep.subr.bf16.mxu0 0
    %620 = vmatpush1.bf16.msra.mxu0 0
    %621 = vmatprep.subr.bf16.mxu0 0
    %622 = vmatpush1.bf16.msra.mxu0 0
    %623 = vmatprep.subr.bf16.mxu0 0
    %624 = vmatpush1.bf16.msra.mxu0 0
    %625 = vmatprep.mubr.bf16.mxu0 0
    %626 = vmatmul.mubr.bf16.gmra.mrb[0].mxu0 %v591
    %v627 = vpop.f32.mrb[0].mxu0
    %v628 = vadd.f32 %v578, %v627
    %v629 = vpop.f32.mrb[0].mxu0
    %v630 = vpop.f32.mrb[0].mxu0
    %v631 = vadd.f32 %v583, %v630
    %v632 = vpop.f32.mrb[0].mxu0
    %633 = vdwg.mxu0
    %vm634 = vcmp.gt.f32.partialorder %v628, 0.0
    %vm635 = vcmp.gt.f32.partialorder %v631, 0.0
    %v636 = vmul.f32 %v628, 0.1
    %v637 = vmul.f32 %v631, 0.1
    %v638 = vsel %vm634, %v628, %v636
    %v639 = vsel %vm635, %v631, %v637
    %v640 = vld [vmem:[%s4] sm:$0xff]
    %v641 = vld [vmem:[%s4 + $0x8] sm:$0xff]
    %643 = vset.pattern.permute.xlu0 0
    %644 = vperm.xlu0 %643, %v640
    %v645 = vpop.permute.xlu0 %644
    %648 = vset.pattern.permute.xlu0 0
    %649 = vperm.xlu0 %648, %v641
    %v650 = vpop.permute.xlu0 %649
    %v652 = vmul.f32 %v645, %v638
    %v653 = vmul.f32 %v650, %v639
    %v654 = vadd.f32 %v652, %v653
    %v655 = vrot.slane %v654, 4
    %v656 = vadd.f32 %v654, %v655
    %v657 = vrot.slane %v656, 2
    %v658 = vadd.f32 %v656, %v657
    %v659 = vrot.slane %v658, 1
    %v660 = vadd.f32 %v658, %v659
    %v661 = vld [vmem:[#allocation2] sm:$0x1]
    %663 = vset.pattern.permute.xlu0 0
    %664 = vperm.xlu0 %663, %v661
    %v665 = vpop.permute.xlu0 %664
    %v667 = vlaneseq
    %v668 = vshrl.u32 %v667, 7
    %v669 = vsub.s32 0, %v668
    %v670 = vrot.slane %v665, %v669
    %v671 = vadd.f32 %v660, %v670
    %v672 = vxor.u32 %v671, 2147483648
    %v673 = vmul.f32 %v672, 1.442695
    %v674 = vpow.pop %v673
    %v675 = vadd.f32 %v674, 1.0
    %v676 = vrcp.pop %v675
    %v677 = vmul.f32 1.0, %v676
    %678 = vst [vmem:[#allocation3] sm:$0x1] %v677
    // Predicated region
    $region38: #{tpu_custom_call.1} parent=1 // pred_check
      _
    $region39: #{tpu_custom_call.1} parent=1 // pred_check_branch
      %680 = sbr.rel (0) target = $region41
    $region40: #{tpu_custom_call.1} parent=1 // pred_region
      %s682 = ssub.s32 16, 16
      %683 = vsyncadd [#allocation4], %s682
      %s685 = sshll.u32 [#allocation3], 4
      %s686 = int_to_ptr.vmem [resolvable:$true] %s685
      %688 = dma.vmem_to_hbm [thread:$0]  %s686, 16, %s9, [#allocation4]
    $region41: #{tpu_custom_call.1} parent=1 // pred_fallthru
      _
    // Predicated region
    $region42: #{tpu_custom_call.1} parent=1 // pred_check
      _
    $region43: #{tpu_custom_call.1} parent=1 // pred_check_branch
      %690 = sbr.rel (0) target = $region45
    $region44: #{tpu_custom_call.1} parent=1 // pred_region
      %691 = dma.done [#allocation4], 16
    $region45: #{tpu_custom_call.1} parent=1 // pred_fallthru
      _
    %692 = vsyncpa [#allocation4], 1

</llo_original>
